<compile_context>
chip_gen: v7x
topology: tpu7x:2x2x1
jax: 0.10.0
libtpu: 0.0.40
codegen_flags: <defaults>
</compile_context>

<pallas_src>
import jax
import jax.numpy as jnp
from jax.experimental import pallas as pl
from jax.experimental.pallas import tpu as pltpu


def _head_kernel(x_ref, w_ref, b_ref, o_ref, acc_ref):
    # x_ref  : (bn, bc, HW)  feature-map tile (HW on lanes, C on sublanes)
    # w_ref  : (bc, Kp)      f32 fc weight^T tile, pre-scaled by 1/(H*W)
    # b_ref  : (1, Kp)       f32 fc bias (K padded to 128)
    # o_ref  : (bn, Kp)      f32 logits tile
    # acc_ref: (bn, Kp)      f32 running partial-logit accumulator (scratch)
    j = pl.program_id(1)  # C reduction axis (last grid axis, "arbitrary")

    @pl.when(j == 0)
    def _():
        acc_ref[...] = jnp.zeros_like(acc_ref)

    # Spatial sum (global average pool * HW): upcast to f32 at the vreg level
    # (v5e VPU has no bf16), cross-lane reduce on the XLU.
    pooled = jnp.sum(x_ref[...].astype(jnp.float32), axis=-1)       # (bn, bc)
    # Partial matmul over this C tile; 1/(H*W) is already folded into w, so
    # sum-pool @ (w/HW) == mean-pool @ fc_weight.T.
    acc_ref[...] += jnp.dot(pooled, w_ref[...],
                            preferred_element_type=jnp.float32)     # (bn, Kp)

    @pl.when(j == pl.num_programs(1) - 1)
    def _():
        o_ref[...] = (acc_ref[...] + b_ref[...]).astype(o_ref.dtype)


def _largest_aligned_divisor(total, cap, align):
    """Largest divisor of `total` that is a multiple of `align` and <= cap."""
    best = None
    hi = min(total, cap)
    d = align
    while d <= hi:
        if total % d == 0:
            best = d
        d += align
    return best


def intermediate_model_head(x_nchw, fc_weight, fc_bias, *,
                            block_n=None, block_c=None):
    """x_nchw: (N, C, H, W) backbone feature map (any float dtype, consumed
    as-is); fc_weight: (K, C) (PyTorch layout); fc_bias: (K,).
    Returns (N, K) f32 logits of mean-pool -> flatten -> (eval) dropout -> fc."""
    n, c, h, w = x_nchw.shape
    k = fc_weight.shape[0]
    hw = h * w

    # Free contiguous collapse -- no transpose / cast / pad passes over HBM.
    x = x_nchw.reshape(n, c, hw)
    itemsize = jnp.dtype(x.dtype).itemsize
    target_x_bytes = 8 * 1024 * 1024  # per x block (x2 pipeline buffers)

    # ---- N tile: multiple-of-8 divisor (output sublane constraint), capped at
    #      N//2 so >=2 tiles exist when possible (v7x 2-TC sharding), and sized
    #      so even bc=8 keeps the x block near target.  Fallback: full extent.
    if block_n is None:
        cap = max(8, n // 2)
        cap = min(cap, max(8, target_x_bytes // max(1, 8 * hw * itemsize)))
        bn = _largest_aligned_divisor(n, cap, 8) or n
    else:
        bn = block_n
        assert n % bn == 0 and (bn % 8 == 0 or bn == n), \
            "block_n must divide N and be a multiple of 8 (or equal N)"

    # ---- C tile: multiple-of-8 divisor sized so the x block is ~target bytes.
    #      Fallback: full extent (no padding of the feature map, ever).
    if block_c is None:
        max_bc = max(8, target_x_bytes // max(1, bn * hw * itemsize))
        bc = _largest_aligned_divisor(c, max_bc, 8) or c
    else:
        bc = block_c
        assert c % bc == 0 and (bc % 8 == 0 or bc == c), \
            "block_c must divide C and be a multiple of 8 (or equal C)"

    # ---- lane-dense output: pad K to a multiple of 128 (tiny arrays only).
    kp = ((k + 127) // 128) * 128
    w_t = fc_weight.T.astype(jnp.float32) / jnp.float32(hw)   # fold mean scale
    w_t = jnp.pad(w_t, ((0, 0), (0, kp - k)))                 # (C, Kp)
    b2d = jnp.pad(fc_bias.astype(jnp.float32).reshape(1, k),
                  ((0, 0), (0, kp - k)))                      # (1, Kp)

    grid = (n // bn, c // bc)

    # VMEM budget from actual buffer sizes (double-buffered inputs/outputs +
    # accumulator scratch), with headroom; capped at 64 MiB (v7x-safe).
    vmem_bytes = (2 * bn * bc * hw * itemsize    # x
                  + 2 * bc * kp * 4              # weight tile
                  + 2 * 1 * kp * 4               # bias
                  + 2 * bn * kp * 4              # output
                  + bn * kp * 4)                 # accumulator scratch
    vmem_limit = min(64 * 1024 * 1024,
                     max(16 * 1024 * 1024, int(vmem_bytes * 1.5)))

    out = pl.pallas_call(
        _head_kernel,
        out_shape=jax.ShapeDtypeStruct((n, kp), jnp.float32),
        grid_spec=pltpu.PrefetchScalarGridSpec(
            num_scalar_prefetch=0,
            grid=grid,
            in_specs=[
                pl.BlockSpec((bn, bc, hw), lambda i, j: (i, j, 0)),
                pl.BlockSpec((bc, kp), lambda i, j: (j, 0)),
                pl.BlockSpec((1, kp), lambda i, j: (0, 0)),
            ],
            out_specs=pl.BlockSpec((bn, kp), lambda i, j: (i, 0)),
            scratch_shapes=[pltpu.VMEM((bn, kp), jnp.float32)],
        ),
        compiler_params=pltpu.CompilerParams(
            dimension_semantics=("parallel", "arbitrary"),
            vmem_limit_bytes=vmem_limit,
        ),
    )(x, w_t, b2d)

    return out[:, :k]


if __name__ == "__main__":
    # Small shapes consistent with the module's (1,1)-pool branch, chosen so
    # both grid axes (N tiles and the C reduction tiles) are exercised.
    N, C, H, W = 16, 32, 16, 16
    NUM_CATEGORIES = 10

    key = jax.random.PRNGKey(0)
    kx, kw, kb = jax.random.split(key, 3)

    x = jax.random.normal(kx, (N, C, H, W), dtype=jnp.float32)

    # Deterministic nn.Linear-style init: U(-1/sqrt(fan_in), 1/sqrt(fan_in)).
    bound = 1.0 / jnp.sqrt(jnp.float32(C))
    fc_weight = jax.random.uniform(kw, (NUM_CATEGORIES, C),
                                   minval=-bound, maxval=bound,
                                   dtype=jnp.float32)
    fc_bias = jax.random.uniform(kb, (NUM_CATEGORIES,),
                                 minval=-bound, maxval=bound,
                                 dtype=jnp.float32)

    out = intermediate_model_head(x, fc_weight, fc_bias,
                                  block_n=8, block_c=8)
    out = jax.block_until_ready(out)

    # Pure-JAX reference of the same forward pass (eval-mode dropout = id),
    # in f32 end-to-end (the kernel no longer forces a bf16 round-trip).
    pooled_ref = jnp.mean(x.reshape(N, C, H * W), axis=-1)
    ref = pooled_ref @ fc_weight.T + fc_bias

    assert out.shape == (N, NUM_CATEGORIES)
    assert jnp.allclose(out, ref, atol=1e-3, rtol=1e-3), \
        float(jnp.max(jnp.abs(out - ref)))

    print("KERNEL_OK")
</pallas_src>

<mosaic_0001>
module attributes {stable_mosaic.version = 11 : i64} {
  func.func @_head_kernel(%arg0: i32, %arg1: i32, %arg2: memref<8x8x256xf32, #tpu.memory_space<vmem>>, %arg3: memref<8x128xf32, #tpu.memory_space<vmem>>, %arg4: memref<1x128xf32, #tpu.memory_space<vmem>>, %arg5: memref<8x128xf32, #tpu.memory_space<vmem>>, %arg6: memref<8x128xf32, #tpu.memory_space<vmem>>) attributes {dimension_semantics = [#tpu.dimension_semantics<parallel>, #tpu.dimension_semantics<arbitrary>], iteration_bounds = array<i64: 2, 4>, scalar_prefetch = 0 : i64, scratch_operands = 1 : i64, tpu.core_type = #tpu.core_type<tc>, window_params = [{transform_indices = @transform_0, window_bounds = array<i64: 8, 8, 256>}, {transform_indices = @transform_1, window_bounds = array<i64: 8, 128>}, {pipeline_mode = #tpu.pipeline_mode<synchronous>, transform_indices = @transform_2, window_bounds = array<i64: 1, 128>}, {transform_indices = @transform_3, window_bounds = array<i64: 8, 128>}]} {
    %c0_i32 = arith.constant 0 : i32
    %0 = arith.cmpi eq, %arg1, %c0_i32 : i32
    %1 = arith.extui %0 : i1 to i32
    %c0_i32_0 = arith.constant 0 : i32
    %2 = arith.cmpi ne, %1, %c0_i32_0 : i32
    scf.if %2 {
      %cst_11 = arith.constant 0.000000e+00 : f32
      %13 = vector.broadcast %cst_11 : f32 to vector<8x128xf32>
      %c0_12 = arith.constant 0 : index
      %c0_13 = arith.constant 0 : index
      %14 = vector.load %arg6[%c0_12, %c0_13] : memref<8x128xf32, #tpu.memory_space<vmem>>, vector<8x128xf32>
      tpu.vector_store %arg6[%c0_12, %c0_13], %13 {strides = array<i32>} : memref<8x128xf32, #tpu.memory_space<vmem>>, vector<8x128xf32>,
    } else {
    }
    %c0 = arith.constant 0 : index
    %c0_1 = arith.constant 0 : index
    %c0_2 = arith.constant 0 : index
    %3 = vector.load %arg2[%c0, %c0_1, %c0_2] : memref<8x8x256xf32, #tpu.memory_space<vmem>>, vector<8x8x256xf32>
    %cst = arith.constant dense<0.000000e+00> : vector<8x8xf32>
    %4 = vector.multi_reduction <add>, %3, %cst [2] : vector<8x8x256xf32> to vector<8x8xf32>
    %c0_3 = arith.constant 0 : index
    %c0_4 = arith.constant 0 : index
    %5 = vector.load %arg6[%c0_3, %c0_4] : memref<8x128xf32, #tpu.memory_space<vmem>>, vector<8x128xf32>
    %c0_5 = arith.constant 0 : index
    %c0_6 = arith.constant 0 : index
    %6 = vector.load %arg3[%c0_5, %c0_6] : memref<8x128xf32, #tpu.memory_space<vmem>>, vector<8x128xf32>
    %cst_7 = arith.constant dense<0.000000e+00> : vector<8x128xf32>
    %7 = tpu.matmul %4, %6, %cst_7 {dimension_numbers = #tpu.dot_dimension_numbers<[1], [0], [0], [1], [0, 0, 1, 1], [], []>} : vector<8x8xf32>, vector<8x128xf32>, vector<8x128xf32> -> vector<8x128xf32>
    %8 = arith.addf %5, %7 : vector<8x128xf32>
    %c0_8 = arith.constant 0 : index
    %c0_9 = arith.constant 0 : index
    %9 = vector.load %arg6[%c0_8, %c0_9] : memref<8x128xf32, #tpu.memory_space<vmem>>, vector<8x128xf32>
    tpu.vector_store %arg6[%c0_8, %c0_9], %8 {strides = array<i32>} : memref<8x128xf32, #tpu.memory_space<vmem>>, vector<8x128xf32>,
    %c3_i32 = arith.constant 3 : i32
    %10 = arith.cmpi eq, %arg1, %c3_i32 : i32
    %11 = arith.extui %10 : i1 to i32
    %c0_i32_10 = arith.constant 0 : i32
    %12 = arith.cmpi ne, %11, %c0_i32_10 : i32
    scf.if %12 {
      %c0_11 = arith.constant 0 : index
      %c0_12 = arith.constant 0 : index
      %13 = vector.load %arg6[%c0_11, %c0_12] : memref<8x128xf32, #tpu.memory_space<vmem>>, vector<8x128xf32>
      %c0_13 = arith.constant 0 : index
      %c0_14 = arith.constant 0 : index
      %14 = vector.load %arg4[%c0_13, %c0_14] : memref<1x128xf32, #tpu.memory_space<vmem>>, vector<1x128xf32>
      %15 = vector.broadcast %14 : vector<1x128xf32> to vector<8x128xf32>
      %16 = arith.addf %13, %15 : vector<8x128xf32>
      %c0_15 = arith.constant 0 : index
      %c0_16 = arith.constant 0 : index
      %17 = vector.load %arg5[%c0_15, %c0_16] : memref<8x128xf32, #tpu.memory_space<vmem>>, vector<8x128xf32>
      tpu.vector_store %arg5[%c0_15, %c0_16], %16 {strides = array<i32>} : memref<8x128xf32, #tpu.memory_space<vmem>>, vector<8x128xf32>,
    } else {
    }
    return
  }
  func.func @transform_0(%arg0: i32, %arg1: i32) -> (i32, i32, i32) {
    %c0_i32 = arith.constant 0 : i32
    %c0_i32_0 = arith.constant 0 : i32
    return %arg0, %arg1, %c0_i32 : i32, i32, i32
  }
  func.func @transform_1(%arg0: i32, %arg1: i32) -> (i32, i32) {
    %c0_i32 = arith.constant 0 : i32
    %c0_i32_0 = arith.constant 0 : i32
    return %arg1, %c0_i32 : i32, i32
  }
  func.func @transform_2(%arg0: i32, %arg1: i32) -> (i32, i32) {
    %c0_i32 = arith.constant 0 : i32
    %c0_i32_0 = arith.constant 0 : i32
    %c0_i32_1 = arith.constant 0 : i32
    return %c0_i32, %c0_i32_0 : i32, i32
  }
  func.func @transform_3(%arg0: i32, %arg1: i32) -> (i32, i32) {
    %c0_i32 = arith.constant 0 : i32
    %c0_i32_0 = arith.constant 0 : i32
    return %arg0, %c0_i32 : i32, i32
  }
}

</mosaic_0001>

<llo_original>
// kernel: tpu_custom_call.1
$region0: #{tpu_custom_call.1}
  #allocation0 [shape = 'u32[]', space=smem, size = 0x4, offset = 0x4, fixed_abs, tag = 'smem constant byte address 0x4 - core index']
  #allocation1 [shape = 'u32[144,128]{1,0:T(1,128)}', space=vmem, size = 0x12000, scoped, tag = 'internal scratch']
  #allocation2 [shape = 'f32[8,128]{1,0:T(8,128)}', space=vmem, size = 0x1000, scoped, tag = 'scratch operand']
  %s0 = inlined_call_operand.hbm [shape: f32[16,32,256], index: 0, kind: input, shape index: {}]
  %s1 = inlined_call_operand.hbm [shape: f32[32,128], index: 1, kind: input, shape index: {}]
  %s2 = inlined_call_operand.vmem [shape: f32[1,128], index: 2, kind: input, shape index: {}]
  %s3 = inlined_call_operand.hbm [shape: f32[16,128], index: 3, kind: output, shape index: {}]
  %s4 = sld [smem:[#allocation0]]
  $region61: #{tpu_custom_call.1} parent=0
    _
  %s6 = ssub.s32 1, %s4
  %s7 = scalar_select 0, %s6, %s4
  $region1: #{tpu_custom_call.1} parent=0
    #allocation3 [shape = 'u8[131072]{0}', space=vmem, size = 0x20000, scoped, tag = 'input window, operand 0']
    #allocation4 [shape = 's32[2]{0}', space=sflag, size = 0x8, scoped, tag = 'scoped memory for tpu_custom_call.1']
    #allocation5 [shape = 's32[2]{0}', space=sflag, size = 0x8, scoped, tag = 'scoped memory for tpu_custom_call.1']
    #allocation6 [shape = 'u8[8192]{0}', space=vmem, size = 0x2000, scoped, tag = 'input window, operand 1']
    #allocation7 [shape = 's32[2]{0}', space=sflag, size = 0x8, scoped, tag = 'scoped memory for tpu_custom_call.1']
    #allocation8 [shape = 'u8[8192]{0}', space=vmem, size = 0x2000, scoped, tag = 'output window, operand 0']
    %8 = vsyncpa [#allocation4], 0
    %s9 = scalar_lea.sflag [#allocation4], 1
    %10 = vsyncpa %s9, 0
    %11 = vsyncpa [#allocation7], 0
    %s12 = scalar_lea.sflag [#allocation7], 1
    %13 = vsyncpa %s12, 0
    %14 = vsyncpa [#allocation5], 0
    %s15 = scalar_lea.sflag [#allocation5], 1
    %16 = vsyncpa %s15, 0
    loop: start=0, step=1, limit=10
    $region2: #{tpu_custom_call.1} parent=1 // loop_pre_header
      _
    $region3: #{tpu_custom_call.1} parent=1 // loop_header
      %s18 = sphi 0, %s22
      %p19 = scmp.ge.s32.totalorder %s18, 10
      %s25 = sphi 0, %s37
      %s26 = sphi 0, %s33
      %s27 = sphi 0, %s25
      %s28 = sphi 0, %s26
      %s29 = sphi 0, %s27
      %s30 = sphi 0, %s28
      %s42 = sphi 0, %s44
      %s45 = sphi 0, %s42
      %s46 = sphi 0, %s45
      %s62 = sphi 0, %s46
      %s68 = sphi 0, %s70
      %s71 = sphi 0, %s68
      %s72 = sphi 0, %s71
      %s88 = sphi 0, %s72
      %s92 = sphi 0, %s92
      %s94 = sphi 0, %s92
      %s95 = sphi 0, %s94
      %s109 = sphi 0, %s95
      %s115 = sphi 0, %s117
      %s118 = sphi 0, %s115
      %s119 = sphi 0, %s118
      %s135 = sphi 0, %s119
    $region4: #{tpu_custom_call.1} parent=1 // loop_header_branch
      %21 = sbr.rel (%p19) target = $region8
    $region5: #{tpu_custom_call.1} parent=1 // loop_body
      %s23 = ssub.s32 %s18, 1
      %s24 = ssub.s32 %s18, 2
      %s31 = sadd.s32 1, %s26
      %p32 = scmp.ge.s32.totalorder %s31, 4
      %s33 = scalar_select %p32, 0, %s31
      %s34 = sadd.s32 1, %s25
      %s35 = scalar_select %p32, %s34, %s25
      %p36 = scmp.ge.s32.totalorder %s35, 2
      %s37 = scalar_select %p36, 0, %s35
      %s38 = ssub.s32 %s25, %s37
      %s39 = ssub.s32 %s26, %s33
      %s40 = sor.u32 %s38, %s39
      %p41 = scmp.eq.s32.totalorder %s40, 0
      %s43 = sadd.s32 %s42, 1
      %s44 = scalar_select %p41, %s42, %s43
      %p47 = pneg %p41
      %p48 = scmp.eq.s32.totalorder %s18, 7
      %p49 = por %p47, %p48
      %p50 = scmp.ne.s32.totalorder %s42, %s45
      %p51 = scmp.eq.s32.totalorder %s18, 0
      %p52 = por %p50, %p51
      %p53 = scmp.ne.s32.totalorder %s42, %s45
      %p54 = scmp.eq.s32.totalorder %s23, 7
      %p55 = por %p53, %p54
      %p56 = scmp.ne.s32.totalorder %s45, %s46
      %p57 = scmp.eq.s32.totalorder %s23, 0
      %p58 = por %p56, %p57
      %p59 = scmp.ne.s32.totalorder %s45, %s46
      %p60 = scmp.eq.s32.totalorder %s24, 7
      %p61 = por %p59, %p60
      %p63 = scmp.ne.s32.totalorder %s46, %s62
      %p64 = scmp.eq.s32.totalorder %s24, 0
      %p65 = por %p63, %p64
      %s66 = ssub.s32 %s26, %s33
      %p67 = scmp.eq.s32.totalorder %s66, 0
      %s69 = sadd.s32 %s68, 1
      %s70 = scalar_select %p67, %s68, %s69
      %p73 = pneg %p67
      %p74 = scmp.eq.s32.totalorder %s18, 7
      %p75 = por %p73, %p74
      %p76 = scmp.ne.s32.totalorder %s68, %s71
      %p77 = scmp.eq.s32.totalorder %s18, 0
      %p78 = por %p76, %p77
      %p79 = scmp.ne.s32.totalorder %s68, %s71
      %p80 = scmp.eq.s32.totalorder %s23, 7
      %p81 = por %p79, %p80
      %p82 = scmp.ne.s32.totalorder %s71, %s72
      %p83 = scmp.eq.s32.totalorder %s23, 0
      %p84 = por %p82, %p83
      %p85 = scmp.ne.s32.totalorder %s71, %s72
      %p86 = scmp.eq.s32.totalorder %s24, 7
      %p87 = por %p85, %p86
      %p89 = scmp.ne.s32.totalorder %s72, %s88
      %p90 = scmp.eq.s32.totalorder %s24, 0
      %p91 = por %p89, %p90
      %s93 = sadd.s32 %s92, 1
      %p96 = scmp.eq.s32.totalorder %s18, 7
      %p97 = scmp.ne.s32.totalorder %s92, %s94
      %p98 = scmp.eq.s32.totalorder %s18, 0
      %p99 = por %p97, %p98
      %p100 = scmp.ne.s32.totalorder %s92, %s94
      %p101 = scmp.eq.s32.totalorder %s23, 7
      %p102 = por %p100, %p101
      %p103 = scmp.ne.s32.totalorder %s94, %s95
      %p104 = scmp.eq.s32.totalorder %s23, 0
      %p105 = por %p103, %p104
      %p106 = scmp.ne.s32.totalorder %s94, %s95
      %p107 = scmp.eq.s32.totalorder %s24, 7
      %p108 = por %p106, %p107
      %p110 = scmp.ne.s32.totalorder %s95, %s109
      %p111 = scmp.eq.s32.totalorder %s24, 0
      %p112 = por %p110, %p111
      %s113 = ssub.s32 %s25, %s37
      %p114 = scmp.eq.s32.totalorder %s113, 0
      %s116 = sadd.s32 %s115, 1
      %s117 = scalar_select %p114, %s115, %s116
      %p120 = pneg %p114
      %p121 = scmp.eq.s32.totalorder %s18, 7
      %p122 = por %p120, %p121
      %p123 = scmp.ne.s32.totalorder %s115, %s118
      %p124 = scmp.eq.s32.totalorder %s18, 0
      %p125 = por %p123, %p124
      %p126 = scmp.ne.s32.totalorder %s115, %s118
      %p127 = scmp.eq.s32.totalorder %s23, 7
      %p128 = por %p126, %p127
      %p129 = scmp.ne.s32.totalorder %s118, %s119
      %p130 = scmp.eq.s32.totalorder %s23, 0
      %p131 = por %p129, %p130
      %p132 = scmp.ne.s32.totalorder %s118, %s119
      %p133 = scmp.eq.s32.totalorder %s24, 7
      %p134 = por %p132, %p133
      %p136 = scmp.ne.s32.totalorder %s119, %s135
      %p137 = scmp.eq.s32.totalorder %s24, 0
      %p138 = por %p136, %p137
      %p139 = scmp.le.s32.totalorder 1, %s18
      %p140 = scmp.lt.s32.totalorder %s18, 9
      %p141 = pnand %p139, %p140
      %p142 = pneg %p141
      // Predicated region
      $region9: #{tpu_custom_call.1} parent=5 // pred_check
        _
      $region10: #{tpu_custom_call.1} parent=5 // pred_check_branch
        %144 = sbr.rel (%p141) target = $region12
      $region11: #{tpu_custom_call.1} parent=5 // pred_region
        %s145 = ssub.s32 %s18, 1
        // Predicated region
        $region13: #{tpu_custom_call.1} parent=11 // pred_check
          %p146 = pneg %p105
        $region14: #{tpu_custom_call.1} parent=11 // pred_check_branch
          %148 = sbr.rel (%p146) target = $region16
        $region15: #{tpu_custom_call.1} parent=11 // pred_region
          _
        $region16: #{tpu_custom_call.1} parent=11 // pred_fallthru
          _
      $region12: #{tpu_custom_call.1} parent=5 // pred_fallthru
        _
      %p149 = scmp.lt.s32.totalorder %s18, 8
      // Predicated region
      $region17: #{tpu_custom_call.1} parent=5 // pred_check
        %p150 = pneg %p149
      $region18: #{tpu_custom_call.1} parent=5 // pred_check_branch
        %152 = sbr.rel (%p150) target = $region20
      $region19: #{tpu_custom_call.1} parent=5 // pred_region
        // Predicated region
        $region21: #{tpu_custom_call.1} parent=19 // pred_check
          %p153 = pneg %p52
        $region22: #{tpu_custom_call.1} parent=19 // pred_check_branch
          %155 = sbr.rel (%p153) target = $region24
        $region23: #{tpu_custom_call.1} parent=19 // pred_region
          %s156 = sand.u32 %s42, 1
          %s157 = scalar_lea.sflag [#allocation4], %s156
          %s158 = sand.u32 %s42, 1
          %s159 = smul.addr %s158, 128
          %s160 = scalar_lea.vmem [#allocation3], %s159
          %s161 = smul.u32 8, %s25
          %s163 = ssub.s32 2048, 2048
          %164 = vsyncadd %s157, %s163
          %s165 = smul.addr %s26, 2
          %s166 = smul.addr %s161, 8
          %s167 = sadd.s32 %s165, %s166
          %s168 = smul.addr %s167, 128
          %s169 = scalar_lea.hbm %s0, %s168
          %s170 = sshll.u32 %s160, 4
          %s171 = int_to_ptr.vmem [resolvable:$true] %s170
          %176 = dma.hbm_to_vmem [thread:$0]  %s169, 2048, %s171, %s157, 1024, 256, 16
        $region24: #{tpu_custom_call.1} parent=19 // pred_fallthru
          _
        // Predicated region
        $region25: #{tpu_custom_call.1} parent=19 // pred_check
          %p177 = pneg %p78
        $region26: #{tpu_custom_call.1} parent=19 // pred_check_branch
          %179 = sbr.rel (%p177) target = $region28
        $region27: #{tpu_custom_call.1} parent=19 // pred_region
          %s180 = sand.u32 %s68, 1
          %s181 = scalar_lea.sflag [#allocation7], %s180
          %s182 = sand.u32 %s68, 1
          %s183 = smul.addr %s182, 8
          %s184 = scalar_lea.vmem [#allocation6], %s183
          %s186 = ssub.s32 128, 128
          %187 = vsyncadd %s181, %s186
          %s188 = smul.addr %s26, 128
          %s189 = scalar_lea.hbm %s1, %s188
          %s191 = sshll.u32 %s184, 4
          %s192 = int_to_ptr.vmem [resolvable:$true] %s191
          %194 = dma.hbm_to_vmem [thread:$0]  %s189, 128, %s192, %s181
        $region28: #{tpu_custom_call.1} parent=19 // pred_fallthru
          _
      $region20: #{tpu_custom_call.1} parent=5 // pred_fallthru
        _
      %p195 = scmp.le.s32.totalorder 1, %s18
      %p196 = scmp.lt.s32.totalorder %s18, 9
      %p197 = pnand %p195, %p196
      %p198 = pneg %p197
      // Predicated region
      $region29: #{tpu_custom_call.1} parent=5 // pred_check
        _
      $region30: #{tpu_custom_call.1} parent=5 // pred_check_branch
        %200 = sbr.rel (%p197) target = $region32
      $region31: #{tpu_custom_call.1} parent=5 // pred_region
        %s201 = ssub.s32 %s18, 1
        %s202 = sand.u32 %s45, 1
        %s203 = scalar_lea.sflag [#allocation4], %s202
        %s204 = sand.u32 %s45, 1
        %s205 = smul.addr %s204, 128
        %s206 = scalar_lea.vmem [#allocation3], %s205
        // Predicated region
        $region33: #{tpu_custom_call.1} parent=31 // pred_check
          %p207 = pneg %p58
        $region34: #{tpu_custom_call.1} parent=31 // pred_check_branch
          %209 = sbr.rel (%p207) target = $region36
        $region35: #{tpu_custom_call.1} parent=31 // pred_region
          %210 = dma.done %s203, 2048
        $region36: #{tpu_custom_call.1} parent=31 // pred_fallthru
          _
        %s211 = sand.u32 %s71, 1
        %s212 = scalar_lea.sflag [#allocation7], %s211
        %s213 = sand.u32 %s71, 1
        %s214 = smul.addr %s213, 8
        %s215 = scalar_lea.vmem [#allocation6], %s214
        // Predicated region
        $region37: #{tpu_custom_call.1} parent=31 // pred_check
          %p216 = pneg %p84
        $region38: #{tpu_custom_call.1} parent=31 // pred_check_branch
          %218 = sbr.rel (%p216) target = $region40
        $region39: #{tpu_custom_call.1} parent=31 // pred_region
          %219 = dma.done %s212, 128
        $region40: #{tpu_custom_call.1} parent=31 // pred_fallthru
          _
        %s220 = sand.u32 %s45, 1
        %s221 = scalar_lea.sflag [#allocation4], %s220
        %s222 = sand.u32 %s45, 1
        %s223 = smul.addr %s222, 128
        %s224 = scalar_lea.vmem [#allocation3], %s223
        %p225 = pneg %p58
        %p226 = pneg %p55
        %s227 = sand.u32 %s71, 1
        %s228 = scalar_lea.sflag [#allocation7], %s227
        %s229 = sand.u32 %s71, 1
        %s230 = smul.addr %s229, 8
        %s231 = scalar_lea.vmem [#allocation6], %s230
        %p232 = pneg %p84
        %p233 = pneg %p81
        %p234 = pneg %p105
        %p235 = pneg %p102
        %p236 = pneg %p131
        %p237 = pneg %p128
        %s238 = sand.u32 %s118, 1
        %s239 = scalar_lea.sflag [#allocation5], %s238
        %s240 = sand.u32 %s118, 1
        %s241 = smul.addr %s240, 8
        %s242 = scalar_lea.vmem [#allocation8], %s241
        %s243 = smul.u32 8, %s27
        %p244 = scmp.eq.s32.totalorder %s28, 0
        // Predicated region
        $region41: #{tpu_custom_call.1} parent=31 // pred_check
          %p245 = pneg %p244
        $region42: #{tpu_custom_call.1} parent=31 // pred_check_branch
          %247 = sbr.rel (%p245) target = $region44
        $region43: #{tpu_custom_call.1} parent=31 // pred_region
          %248 = vst [vmem:[#allocation2] sm:$0xff] 0.0
        $region44: #{tpu_custom_call.1} parent=31 // pred_fallthru
          _
        %v249 = vld [vmem:[%s206] sm:$0xff]
        %v250 = vld [vmem:[%s206 + $0x8] sm:$0xff]
        %v251 = vld [vmem:[%s206 + $0x10] sm:$0xff]
        %v252 = vld [vmem:[%s206 + $0x18] sm:$0xff]
        %v253 = vld [vmem:[%s206 + $0x20] sm:$0xff]
        %v254 = vld [vmem:[%s206 + $0x28] sm:$0xff]
        %v255 = vld [vmem:[%s206 + $0x30] sm:$0xff]
        %v256 = vld [vmem:[%s206 + $0x38] sm:$0xff]
        %v257 = vld [vmem:[%s206 + $0x40] sm:$0xff]
        %v258 = vld [vmem:[%s206 + $0x48] sm:$0xff]
        %v259 = vld [vmem:[%s206 + $0x50] sm:$0xff]
        %v260 = vld [vmem:[%s206 + $0x58] sm:$0xff]
        %v261 = vld [vmem:[%s206 + $0x60] sm:$0xff]
        %v262 = vld [vmem:[%s206 + $0x68] sm:$0xff]
        %v263 = vld [vmem:[%s206 + $0x70] sm:$0xff]
        %v264 = vld [vmem:[%s206 + $0x78] sm:$0xff]
        %v265 = vadd.f32 %v249, %v250
        %266 = vadd.xlane.f32.xlu0 %v265
        %v267 = vpop.xlane.xlu0 %266
        %v268 = vadd.f32 %v251, %v252
        %269 = vadd.xlane.f32.xlu0 %v268
        %v270 = vpop.xlane.xlu0 %269
        %v271 = vadd.f32 %v253, %v254
        %272 = vadd.xlane.f32.xlu0 %v271
        %v273 = vpop.xlane.xlu0 %272
        %v274 = vadd.f32 %v255, %v256
        %275 = vadd.xlane.f32.xlu0 %v274
        %v276 = vpop.xlane.xlu0 %275
        %v277 = vadd.f32 %v257, %v258
        %278 = vadd.xlane.f32.xlu0 %v277
        %v279 = vpop.xlane.xlu0 %278
        %v280 = vadd.f32 %v259, %v260
        %281 = vadd.xlane.f32.xlu0 %v280
        %v282 = vpop.xlane.xlu0 %281
        %v283 = vadd.f32 %v261, %v262
        %284 = vadd.xlane.f32.xlu0 %v283
        %v285 = vpop.xlane.xlu0 %284
        %v286 = vadd.f32 %v263, %v264
        %287 = vadd.xlane.f32.xlu0 %v286
        %v288 = vpop.xlane.xlu0 %287
        %v289 = vld [vmem:[#allocation2] sm:$0xff]
        %v290 = vld [vmem:[%s215] sm:$0xff]
        %v299 = vlaneseq
        %v300 = vand.u32 %v299, 127
        %v301 = vlaneseq
        %v302 = vshrl.u32 %v301, 7
        %v303 = vsub.s32 %v300, %v302
        %v304 = vrot.slane %v267, %v303
        %v305 = vlaneseq
        %v306 = vshrl.u32 %v305, 7
        %v307 = vsub.s32 %v300, %v306
        %v308 = vrot.slane %v270, %v307
        %v309 = vlaneseq
        %v310 = vshrl.u32 %v309, 7
        %v311 = vsub.s32 %v300, %v310
        %v312 = vrot.slane %v273, %v311
        %v313 = vlaneseq
        %v314 = vshrl.u32 %v313, 7
        %v315 = vsub.s32 %v300, %v314
        %v316 = vrot.slane %v276, %v315
        %v317 = vlaneseq
        %v318 = vshrl.u32 %v317, 7
        %v319 = vsub.s32 %v300, %v318
        %v320 = vrot.slane %v279, %v319
        %v321 = vlaneseq
        %v322 = vshrl.u32 %v321, 7
        %v323 = vsub.s32 %v300, %v322
        %v324 = vrot.slane %v282, %v323
        %v325 = vlaneseq
        %v326 = vshrl.u32 %v325, 7
        %v327 = vsub.s32 %v300, %v326
        %v328 = vrot.slane %v285, %v327
        %v329 = vlaneseq
        %v330 = vshrl.u32 %v329, 7
        %v331 = vsub.s32 %v300, %v330
        %v332 = vrot.slane %v288, %v331
        %vm333 = vcmask 1041409
        %v334 = vsel %vm333, %v308, %v304
        %vm335 = vcmask 1042434
        %v336 = vsel %vm335, %v312, %v334
        %vm337 = vcmask 1043459
        %v338 = vsel %vm337, %v316, %v336
        %vm339 = vcmask 1044484
        %v340 = vsel %vm339, %v320, %v338
        %vm341 = vcmask 1045509
        %v342 = vsel %vm341, %v324, %v340
        %vm343 = vcmask 1046534
        %v344 = vsel %vm343, %v328, %v342
        %vm345 = vcmask 1047559
        %v346 = vsel %vm345, %v332, %v344
        %vm347 = vcmask 64512
        %v348 = vsel %vm347, %v346, 0
        %350 = vmatprep.subr.mxu0 0.0
        %351 = vmatpush1.msra.mxu0 %v290
        %352 = vmatprep.subr.mxu0 0.0
        %353 = vmatpush1.msra.mxu0 0.0
        %354 = vmatprep.subr.mxu0 0.0
        %355 = vmatpush1.msra.mxu0 0.0
        %356 = vmatprep.subr.mxu0 0.0
        %357 = vmatpush1.msra.mxu0 0.0
        %358 = vmatprep.subr.mxu0 0.0
        %359 = vmatpush1.msra.mxu0 0.0
        %360 = vmatprep.subr.mxu0 0.0
        %361 = vmatpush1.msra.mxu0 0.0
        %362 = vmatprep.subr.mxu0 0.0
        %363 = vmatpush1.msra.mxu0 0.0
        %364 = vmatprep.subr.mxu0 0.0
        %365 = vmatpush1.msra.mxu0 0.0
        %366 = vmatprep.subr.mxu0 0.0
        %367 = vmatpush1.msra.mxu0 0.0
        %368 = vmatprep.subr.mxu0 0.0
        %369 = vmatpush1.msra.mxu0 0.0
        %370 = vmatprep.subr.mxu0 0.0
        %371 = vmatpush1.msra.mxu0 0.0
        %372 = vmatprep.subr.mxu0 0.0
        %373 = vmatpush1.msra.mxu0 0.0
        %374 = vmatprep.subr.mxu0 0.0
        %375 = vmatpush1.msra.mxu0 0.0
        %376 = vmatprep.subr.mxu0 0.0
        %377 = vmatpush1.msra.mxu0 0.0
        %378 = vmatprep.subr.mxu0 0.0
        %379 = vmatpush1.msra.mxu0 0.0
        %380 = vmatprep.subr.mxu0 0.0
        %381 = vmatpush1.msra.mxu0 0.0
        %382 = vmatprep.subr.mxu0 0.0
        %383 = vmatpush1.msra.mxu0 0.0
        %384 = vmatprep.subr.mxu0 0.0
        %385 = vmatpush1.msra.mxu0 0.0
        %386 = vmatprep.subr.mxu0 0.0
        %387 = vmatpush1.msra.mxu0 0.0
        %388 = vmatprep.subr.mxu0 0.0
        %389 = vmatpush1.msra.mxu0 0.0
        %390 = vmatprep.subr.mxu0 0.0
        %391 = vmatpush1.msra.mxu0 0.0
        %392 = vmatprep.subr.mxu0 0.0
        %393 = vmatpush1.msra.mxu0 0.0
        %394 = vmatprep.subr.mxu0 0.0
        %395 = vmatpush1.msra.mxu0 0.0
        %396 = vmatprep.subr.mxu0 0.0
        %397 = vmatpush1.msra.mxu0 0.0
        %398 = vmatprep.subr.mxu0 0.0
        %399 = vmatpush1.msra.mxu0 0.0
        %400 = vmatprep.subr.mxu0 0.0
        %401 = vmatpush1.msra.mxu0 0.0
        %402 = vmatprep.subr.mxu0 0.0
        %403 = vmatpush1.msra.mxu0 0.0
        %404 = vmatprep.subr.mxu0 0.0
        %405 = vmatpush1.msra.mxu0 0.0
        %406 = vmatprep.subr.mxu0 0.0
        %407 = vmatpush1.msra.mxu0 0.0
        %408 = vmatprep.subr.mxu0 0.0
        %409 = vmatpush1.msra.mxu0 0.0
        %410 = vmatprep.subr.mxu0 0.0
        %411 = vmatpush1.msra.mxu0 0.0
        %412 = vmatprep.subr.mxu0 0.0
        %413 = vmatpush1.msra.mxu0 0.0
        %414 = vmatprep.mubr.f32.mxu0 0.0
        %415 = vmatmul.mubr.f32.gmra.mrb[0].mxu0 %v348
        %v416 = vpop.f32.mrb[0].mxu0
        %v417 = vadd.f32 0.0, %v416
        %v418 = vpop.f32.mrb[0].mxu0
        %419 = vdwg.mxu0
        %v420 = vadd.f32 %v289, %v417
        %421 = vst [vmem:[#allocation2] sm:$0xff] %v420
        %p422 = scmp.eq.s32.totalorder %s28, 3
        // Predicated region
        $region45: #{tpu_custom_call.1} parent=31 // pred_check
          %p423 = pneg %p422
        $region46: #{tpu_custom_call.1} parent=31 // pred_check_branch
          %425 = sbr.rel (%p423) target = $region48
        $region47: #{tpu_custom_call.1} parent=31 // pred_region
          %v426 = vld [vmem:[#allocation2] sm:$0xff]
          %v427 = vld [vmem:[%s2] sm:$0x1]
          %v429 = vlaneseq
          %v430 = vshrl.u32 %v429, 7
          %v431 = vsub.s32 0, %v430
          %v432 = vrot.slane %v427, %v431
          %v434 = vadd.f32 %v426, %v432
          %435 = vst [vmem:[%s242] sm:$0xff] %v434
        $region48: #{tpu_custom_call.1} parent=31 // pred_fallthru
          _
        %s436 = sand.u32 %s118, 1
        %s437 = scalar_lea.sflag [#allocation5], %s436
        %s438 = sand.u32 %s118, 1
        %s439 = smul.addr %s438, 8
        %s440 = scalar_lea.vmem [#allocation8], %s439
        // Predicated region
        $region49: #{tpu_custom_call.1} parent=31 // pred_check
          %p441 = pneg %p128
        $region50: #{tpu_custom_call.1} parent=31 // pred_check_branch
          %443 = sbr.rel (%p441) target = $region52
        $region51: #{tpu_custom_call.1} parent=31 // pred_region
          %s445 = ssub.s32 128, 128
          %446 = vsyncadd %s437, %s445
          %s447 = smul.addr %s27, 128
          %s448 = scalar_lea.hbm %s3, %s447
          %s450 = sshll.u32 %s440, 4
          %s451 = int_to_ptr.vmem [resolvable:$true] %s450
          %453 = dma.vmem_to_hbm [thread:$0]  %s451, 128, %s448, %s437
        $region52: #{tpu_custom_call.1} parent=31 // pred_fallthru
          _
      $region32: #{tpu_custom_call.1} parent=5 // pred_fallthru
        _
      %p454 = scmp.le.s32.totalorder 2, %s18
      // Predicated region
      $region53: #{tpu_custom_call.1} parent=5 // pred_check
        %p455 = pneg %p454
      $region54: #{tpu_custom_call.1} parent=5 // pred_check_branch
        %457 = sbr.rel (%p455) target = $region56
      $region55: #{tpu_custom_call.1} parent=5 // pred_region
        %s458 = ssub.s32 %s18, 2
        // Predicated region
        $region57: #{tpu_custom_call.1} parent=55 // pred_check
          %p459 = pneg %p134
        $region58: #{tpu_custom_call.1} parent=55 // pred_check_branch
          %461 = sbr.rel (%p459) target = $region60
        $region59: #{tpu_custom_call.1} parent=55 // pred_region
          %s462 = sand.u32 %s119, 1
          %s463 = scalar_lea.sflag [#allocation5], %s462
          %s464 = sand.u32 %s119, 1
          %s465 = smul.addr %s464, 8
          %s466 = scalar_lea.vmem [#allocation8], %s465
          %467 = dma.done %s463, 128
        $region60: #{tpu_custom_call.1} parent=55 // pred_fallthru
          _
      $region56: #{tpu_custom_call.1} parent=5 // pred_fallthru
        _
    $region6: #{tpu_custom_call.1} parent=1 // loop_footer
      %s22 = sadd.s32 1, %s18
    $region7: #{tpu_custom_call.1} parent=1 // loop_footer_branch
      %17 = sbr.rel target = $region3
    $region8: #{tpu_custom_call.1} parent=1 // loop_exit
      _
    %468 = vsyncpa [#allocation4], 1
    %s469 = scalar_lea.sflag [#allocation4], 1
    %470 = vsyncpa %s469, 1
    %471 = vsyncpa [#allocation7], 1
    %s472 = scalar_lea.sflag [#allocation7], 1
    %473 = vsyncpa %s472, 1
    %474 = vsyncpa [#allocation5], 1
    %s475 = scalar_lea.sflag [#allocation5], 1
    %476 = vsyncpa %s475, 1

</llo_original>
